<compile_context>
chip_gen: v5e
topology: v5e:2x2
jax: 0.10.0
libtpu: 0.0.40
codegen_flags: <defaults>
</compile_context>

<pallas_src>
import jax
import jax.numpy as jnp
from jax.experimental import pallas as pl
from jax.experimental.pallas import tpu as pltpu


def _conv_relu_kernel(x_ref, b_ref, bias_ref, o_ref):
    # x_ref:    (1, H + KH-1, W*Cin)    row-halo-padded input (lane = W*Cin)
    # b_ref:    (KH, W*Cin, W*Cout)     block-Toeplitz weights ('same' W-pad baked in)
    # bias_ref: (1, W*Cout)             bias tiled over W (lane-dense)
    # o_ref:    (1, H, W*Cout)          lane-dense output slab
    H = o_ref.shape[1]
    KH = b_ref.shape[0]

    x = x_ref[0]                                   # (H+KH-1, W*Cin)
    acc = jnp.zeros(o_ref.shape[1:], jnp.float32)  # (H, W*Cout) f32 accumulator
    for dy in range(KH):                           # static unroll: KH MXU matmuls
        acc = acc + jnp.dot(x[dy:dy + H, :], b_ref[dy],
                            preferred_element_type=jnp.float32)
    acc = acc + bias_ref[0].astype(jnp.float32)
    o_ref[0] = jnp.maximum(acc, 0.0).astype(o_ref.dtype)  # ReLU, f32 epilogue


def _toeplitz_weights(weight, W):
    """(Cout, Cin, KH, KW) -> (KH, W*Cin, W*Cout) banded matrix.

    B[dy, w'*Cin + ci, w*Cout + co] = weight[co, ci, dy, w' - w + KW//2]
    for valid taps, 0 otherwise ('same' zero padding along W folded in).
    Built once in the wrapper from the tiny weight tensor.
    """
    Cout, Cin, KH, KW = weight.shape
    w_hwio = jnp.transpose(weight, (2, 3, 1, 0))            # (KH, KW, Cin, Cout)
    wp = jnp.arange(W)[:, None]                             # input column  w'
    wo = jnp.arange(W)[None, :]                             # output column w
    dx = wp - wo + (KW // 2)                                 # tap index
    valid = (dx >= 0) & (dx < KW)
    band = w_hwio[:, jnp.clip(dx, 0, KW - 1)]               # (KH, W, W, Cin, Cout)
    band = band * valid[None, :, :, None, None].astype(band.dtype)
    return band.transpose(0, 1, 3, 2, 4).reshape(KH, W * Cin, W * Cout)


def conv_block_forward(x_nchw, weight, bias, *, compute_dtype=None):
    """ConvBlock forward: ReLU(conv2d_same(x, weight) + bias).

    x_nchw: (N, Cin, H, W), weight: (Cout, Cin, KH, KW), bias: (Cout,)
    returns (N, Cout, H, W) in x_nchw.dtype.
    compute_dtype: optionally jnp.bfloat16 on v6e/v7x (f32 accumulation kept).
    """
    N, Cin, H, W = x_nchw.shape
    Cout, _, KH, KW = weight.shape
    assert KH % 2 == 1 and KW % 2 == 1, "only odd kernels give symmetric 'same'"
    ph = KH // 2
    cdt = x_nchw.dtype if compute_dtype is None else compute_dtype

    # Glue (NCHW API compatibility): one fused transpose/reshape/pad pass in,
    # one transpose out.  Disappears if the surrounding model stays lane-packed.
    x_flat = jnp.transpose(x_nchw, (0, 2, 3, 1)).reshape(N, H, W * Cin)
    x_vpad = jnp.pad(x_flat, ((0, 0), (ph, ph), (0, 0))).astype(cdt)

    b_toe = _toeplitz_weights(weight, W).astype(cdt)        # (KH, W*Cin, W*Cout)
    bias_lane = jnp.tile(bias, W).reshape(1, W * Cout)      # f32, lane-dense

    Hp = H + 2 * ph
    out_flat = pl.pallas_call(
        _conv_relu_kernel,
        out_shape=jax.ShapeDtypeStruct((N, H, W * Cout), x_nchw.dtype),
        grid_spec=pltpu.PrefetchScalarGridSpec(
            num_scalar_prefetch=0,
            grid=(N,),
            in_specs=[
                pl.BlockSpec((1, Hp, W * Cin), lambda n: (n, 0, 0)),
                pl.BlockSpec((KH, W * Cin, W * Cout), lambda n: (0, 0, 0)),
                pl.BlockSpec((1, W * Cout), lambda n: (0, 0)),
            ],
            out_specs=pl.BlockSpec((1, H, W * Cout), lambda n: (n, 0, 0)),
        ),
        compiler_params=pltpu.CompilerParams(
            dimension_semantics=("parallel",)),
    )(x_vpad, b_toe, bias_lane)

    return out_flat.reshape(N, H, W, Cout).transpose(0, 3, 1, 2)


if __name__ == "__main__":
    # Module config: in_channels=4, out_channels=8, kernel_size=(3,3),
    # activation=ReLU, batch_norm=False, padding='same', dropout=0, bias=True.
    N, Cin, H, W = 2, 4, 16, 16
    Cout, KH, KW = 8, 3, 3

    key = jax.random.PRNGKey(0)
    kx, kw, kb = jax.random.split(key, 3)

    x = jax.random.normal(kx, (N, Cin, H, W), dtype=jnp.float32)
    fan_in = Cin * KH * KW
    bound = 1.0 / jnp.sqrt(fan_in)
    weight = jax.random.uniform(kw, (Cout, Cin, KH, KW),
                                minval=-bound, maxval=bound, dtype=jnp.float32)
    bias = jax.random.uniform(kb, (Cout,), minval=-bound, maxval=bound,
                              dtype=jnp.float32)

    # Pure-JAX reference.
    ref = jax.lax.conv_general_dilated(
        x, weight, window_strides=(1, 1), padding="SAME",
        dimension_numbers=("NCHW", "OIHW", "NCHW"))
    ref = jnp.maximum(ref + bias.reshape(1, Cout, 1, 1), 0.0)

    # f32 path (exact check).
    out = jax.block_until_ready(conv_block_forward(x, weight, bias))
    assert out.shape == (N, Cout, H, W)
    assert jnp.max(jnp.abs(out - ref)) < 1e-4

    # bf16 compute path (v6e/v7x DMA-byte saver), f32 accumulation kept.
    out_bf16 = jax.block_until_ready(
        conv_block_forward(x, weight, bias, compute_dtype=jnp.bfloat16))
    assert out_bf16.shape == (N, Cout, H, W)
    assert jnp.max(jnp.abs(out_bf16 - ref)) < 1e-1

    print("KERNEL_OK")
</pallas_src>

<mosaic_0001>
module attributes {stable_mosaic.version = 11 : i64} {
  func.func @_conv_relu_kernel(%arg0: i32, %arg1: memref<1x18x64xf32, #tpu.memory_space<vmem>>, %arg2: memref<3x64x128xf32, #tpu.memory_space<vmem>>, %arg3: memref<1x128xf32, #tpu.memory_space<vmem>>, %arg4: memref<1x16x128xf32, #tpu.memory_space<vmem>>) attributes {dimension_semantics = [#tpu.dimension_semantics<parallel>], iteration_bounds = array<i64: 2>, scalar_prefetch = 0 : i64, scratch_operands = 0 : i64, tpu.core_type = #tpu.core_type<tc>, window_params = [{transform_indices = @transform_0, window_bounds = array<i64: 1, 18, 64>}, {pipeline_mode = #tpu.pipeline_mode<synchronous>, transform_indices = @transform_1, window_bounds = array<i64: 3, 64, 128>}, {pipeline_mode = #tpu.pipeline_mode<synchronous>, transform_indices = @transform_2, window_bounds = array<i64: 1, 128>}, {transform_indices = @transform_3, window_bounds = array<i64: 1, 16, 128>}]} {
    %c0 = arith.constant 0 : index
    %c0_0 = arith.constant 0 : index
    %c0_1 = arith.constant 0 : index
    %0 = vector.load %arg1[%c0, %c0_0, %c0_1] : memref<1x18x64xf32, #tpu.memory_space<vmem>>, vector<1x18x64xf32>
    %1 = vector.shape_cast %0 : vector<1x18x64xf32> to vector<18x64xf32>
    %cst = arith.constant 0.000000e+00 : f32
    %2 = vector.broadcast %cst : f32 to vector<16x128xf32>
    %3 = vector.extract_strided_slice %1 {offsets = [0, 0], sizes = [16, 64], strides = [1, 1]} : vector<18x64xf32> to vector<16x64xf32>
    %c0_2 = arith.constant 0 : index
    %c0_3 = arith.constant 0 : index
    %c0_4 = arith.constant 0 : index
    %4 = vector.load %arg2[%c0_2, %c0_3, %c0_4] : memref<3x64x128xf32, #tpu.memory_space<vmem>>, vector<1x64x128xf32>
    %5 = vector.shape_cast %4 : vector<1x64x128xf32> to vector<64x128xf32>
    %cst_5 = arith.constant dense<0.000000e+00> : vector<16x128xf32>
    %6 = tpu.matmul %3, %5, %cst_5 {dimension_numbers = #tpu.dot_dimension_numbers<[1], [0], [0], [1], [0, 0, 1, 1], [], []>} : vector<16x64xf32>, vector<64x128xf32>, vector<16x128xf32> -> vector<16x128xf32>
    %7 = arith.addf %2, %6 : vector<16x128xf32>
    %8 = vector.extract_strided_slice %1 {offsets = [1, 0], sizes = [16, 64], strides = [1, 1]} : vector<18x64xf32> to vector<16x64xf32>
    %c1 = arith.constant 1 : index
    %c0_6 = arith.constant 0 : index
    %c0_7 = arith.constant 0 : index
    %9 = vector.load %arg2[%c1, %c0_6, %c0_7] : memref<3x64x128xf32, #tpu.memory_space<vmem>>, vector<1x64x128xf32>
    %10 = vector.shape_cast %9 : vector<1x64x128xf32> to vector<64x128xf32>
    %cst_8 = arith.constant dense<0.000000e+00> : vector<16x128xf32>
    %11 = tpu.matmul %8, %10, %cst_8 {dimension_numbers = #tpu.dot_dimension_numbers<[1], [0], [0], [1], [0, 0, 1, 1], [], []>} : vector<16x64xf32>, vector<64x128xf32>, vector<16x128xf32> -> vector<16x128xf32>
    %12 = arith.addf %7, %11 : vector<16x128xf32>
    %13 = vector.extract_strided_slice %1 {offsets = [2, 0], sizes = [16, 64], strides = [1, 1]} : vector<18x64xf32> to vector<16x64xf32>
    %c2 = arith.constant 2 : index
    %c0_9 = arith.constant 0 : index
    %c0_10 = arith.constant 0 : index
    %14 = vector.load %arg2[%c2, %c0_9, %c0_10] : memref<3x64x128xf32, #tpu.memory_space<vmem>>, vector<1x64x128xf32>
    %15 = vector.shape_cast %14 : vector<1x64x128xf32> to vector<64x128xf32>
    %cst_11 = arith.constant dense<0.000000e+00> : vector<16x128xf32>
    %16 = tpu.matmul %13, %15, %cst_11 {dimension_numbers = #tpu.dot_dimension_numbers<[1], [0], [0], [1], [0, 0, 1, 1], [], []>} : vector<16x64xf32>, vector<64x128xf32>, vector<16x128xf32> -> vector<16x128xf32>
    %17 = arith.addf %12, %16 : vector<16x128xf32>
    %c0_12 = arith.constant 0 : index
    %c0_13 = arith.constant 0 : index
    %18 = vector.load %arg3[%c0_12, %c0_13] : memref<1x128xf32, #tpu.memory_space<vmem>>, vector<1x128xf32>
    %19 = vector.shape_cast %18 : vector<1x128xf32> to vector<128xf32>
    %20 = vector.shape_cast %19 : vector<128xf32> to vector<1x128xf32>
    %21 = vector.broadcast %20 : vector<1x128xf32> to vector<16x128xf32>
    %22 = arith.addf %17, %21 : vector<16x128xf32>
    %cst_14 = arith.constant 0.000000e+00 : f32
    %23 = vector.broadcast %cst_14 : f32 to vector<16x128xf32>
    %24 = arith.maximumf %22, %23 : vector<16x128xf32>
    %c0_15 = arith.constant 0 : index
    %c0_16 = arith.constant 0 : index
    %c0_17 = arith.constant 0 : index
    %25 = vector.load %arg4[%c0_15, %c0_16, %c0_17] : memref<1x16x128xf32, #tpu.memory_space<vmem>>, vector<1x16x128xf32>
    %26 = vector.shape_cast %25 : vector<1x16x128xf32> to vector<16x128xf32>
    %27 = vector.shape_cast %24 : vector<16x128xf32> to vector<1x16x128xf32>
    tpu.vector_store %arg4[%c0_15, %c0_16, %c0_17], %27 {strides = array<i32>} : memref<1x16x128xf32, #tpu.memory_space<vmem>>, vector<1x16x128xf32>,
    return
  }
  func.func @transform_0(%arg0: i32) -> (i32, i32, i32) {
    %c0_i32 = arith.constant 0 : i32
    %c0_i32_0 = arith.constant 0 : i32
    %c0_i32_1 = arith.constant 0 : i32
    return %arg0, %c0_i32, %c0_i32_0 : i32, i32, i32
  }
  func.func @transform_1(%arg0: i32) -> (i32, i32, i32) {
    %c0_i32 = arith.constant 0 : i32
    %c0_i32_0 = arith.constant 0 : i32
    %c0_i32_1 = arith.constant 0 : i32
    %c0_i32_2 = arith.constant 0 : i32
    return %c0_i32, %c0_i32_0, %c0_i32_1 : i32, i32, i32
  }
  func.func @transform_2(%arg0: i32) -> (i32, i32) {
    %c0_i32 = arith.constant 0 : i32
    %c0_i32_0 = arith.constant 0 : i32
    %c0_i32_1 = arith.constant 0 : i32
    return %c0_i32, %c0_i32_0 : i32, i32
  }
  func.func @transform_3(%arg0: i32) -> (i32, i32, i32) {
    %c0_i32 = arith.constant 0 : i32
    %c0_i32_0 = arith.constant 0 : i32
    %c0_i32_1 = arith.constant 0 : i32
    return %arg0, %c0_i32, %c0_i32_0 : i32, i32, i32
  }
}

</mosaic_0001>

<llo_original>
// kernel: tpu_custom_call.1
$region0: #{tpu_custom_call.1}
  #allocation0 [shape = 'u32[]', space=smem, size = 0x4, offset = 0x4, fixed_abs, tag = 'smem constant byte address 0x4 - core index']
  #allocation1 [shape = 'u32[72,128]{1,0:T(1,128)}', space=vmem, size = 0x9000, scoped, tag = 'internal scratch']
  %s0 = inlined_call_operand.vmem [shape: f32[2,18,64], index: 0, kind: input, shape index: {}]
  %s1 = inlined_call_operand.hbm [shape: f32[3,64,128], index: 1, kind: input, shape index: {}]
  %s2 = inlined_call_operand.vmem [shape: f32[1,128], index: 2, kind: input, shape index: {}]
  %s3 = inlined_call_operand.hbm [shape: f32[2,16,128], index: 3, kind: output, shape index: {}]
  %s4 = sld [smem:[#allocation0]]
  $region49: #{tpu_custom_call.1} parent=0
    _
  %s6 = ssub.s32 1, %s4
  %s7 = scalar_select 0, %s6, %s4
  $region1: #{tpu_custom_call.1} parent=0
    #allocation2 [shape = 'u8[98304]{0}', space=vmem, size = 0x18000, scoped, tag = 'input window, operand 1, single buffered']
    #allocation3 [shape = 's32[2]{0}', space=sflag, size = 0x8, scoped, tag = 'scoped memory for tpu_custom_call.1']
    #allocation4 [shape = 's32[2]{0}', space=sflag, size = 0x8, scoped, tag = 'scoped memory for tpu_custom_call.1']
    #allocation5 [shape = 'u8[16384]{0}', space=vmem, size = 0x4000, scoped, tag = 'output window, operand 0']
    %8 = vsyncpa [#allocation3], 0
    %9 = vsyncpa [#allocation4], 0
    %s10 = scalar_lea.sflag [#allocation4], 1
    %11 = vsyncpa %s10, 0
    loop: start=0, step=1, limit=4
    $region2: #{tpu_custom_call.1} parent=1 // loop_pre_header
      _
    $region3: #{tpu_custom_call.1} parent=1 // loop_header
      %s13 = sphi 0, %s17
      %p14 = scmp.ge.s32.totalorder %s13, 4
      %s23 = sphi 0, %s25
      %s26 = sphi 0, %s23
      %s27 = sphi 0, %s26
      %s43 = sphi 0, %s27
      %s47 = sphi 0, %s47
      %s49 = sphi 0, %s47
      %s50 = sphi 0, %s49
      %s64 = sphi 0, %s50
      %s68 = sphi 0, %s68
      %s70 = sphi 0, %s68
      %s71 = sphi 0, %s70
      %s85 = sphi 0, %s71
      %s91 = sphi 0, %s93
      %s94 = sphi 0, %s91
      %s95 = sphi 0, %s94
      %s111 = sphi 0, %s95
    $region4: #{tpu_custom_call.1} parent=1 // loop_header_branch
      %16 = sbr.rel (%p14) target = $region8
    $region5: #{tpu_custom_call.1} parent=1 // loop_body
      %s18 = ssub.s32 %s13, 1
      %s19 = ssub.s32 %s13, 2
      %s20 = sadd.s32 %s13, 1
      %s21 = ssub.s32 %s13, %s20
      %p22 = scmp.eq.s32.totalorder %s21, 0
      %s24 = sadd.s32 %s23, 1
      %s25 = scalar_select %p22, %s23, %s24
      %p28 = pneg %p22
      %p29 = scmp.eq.s32.totalorder %s13, 1
      %p30 = por %p28, %p29
      %p31 = scmp.ne.s32.totalorder %s23, %s26
      %p32 = scmp.eq.s32.totalorder %s13, 0
      %p33 = por %p31, %p32
      %p34 = scmp.ne.s32.totalorder %s23, %s26
      %p35 = scmp.eq.s32.totalorder %s18, 1
      %p36 = por %p34, %p35
      %p37 = scmp.ne.s32.totalorder %s26, %s27
      %p38 = scmp.eq.s32.totalorder %s18, 0
      %p39 = por %p37, %p38
      %p40 = scmp.ne.s32.totalorder %s26, %s27
      %p41 = scmp.eq.s32.totalorder %s19, 1
      %p42 = por %p40, %p41
      %p44 = scmp.ne.s32.totalorder %s27, %s43
      %p45 = scmp.eq.s32.totalorder %s19, 0
      %p46 = por %p44, %p45
      %s48 = sadd.s32 %s47, 1
      %p51 = scmp.eq.s32.totalorder %s13, 1
      %p52 = scmp.ne.s32.totalorder %s47, %s49
      %p53 = scmp.eq.s32.totalorder %s13, 0
      %p54 = por %p52, %p53
      %p55 = scmp.ne.s32.totalorder %s47, %s49
      %p56 = scmp.eq.s32.totalorder %s18, 1
      %p57 = por %p55, %p56
      %p58 = scmp.ne.s32.totalorder %s49, %s50
      %p59 = scmp.eq.s32.totalorder %s18, 0
      %p60 = por %p58, %p59
      %p61 = scmp.ne.s32.totalorder %s49, %s50
      %p62 = scmp.eq.s32.totalorder %s19, 1
      %p63 = por %p61, %p62
      %p65 = scmp.ne.s32.totalorder %s50, %s64
      %p66 = scmp.eq.s32.totalorder %s19, 0
      %p67 = por %p65, %p66
      %s69 = sadd.s32 %s68, 1
      %p72 = scmp.eq.s32.totalorder %s13, 1
      %p73 = scmp.ne.s32.totalorder %s68, %s70
      %p74 = scmp.eq.s32.totalorder %s13, 0
      %p75 = por %p73, %p74
      %p76 = scmp.ne.s32.totalorder %s68, %s70
      %p77 = scmp.eq.s32.totalorder %s18, 1
      %p78 = por %p76, %p77
      %p79 = scmp.ne.s32.totalorder %s70, %s71
      %p80 = scmp.eq.s32.totalorder %s18, 0
      %p81 = por %p79, %p80
      %p82 = scmp.ne.s32.totalorder %s70, %s71
      %p83 = scmp.eq.s32.totalorder %s19, 1
      %p84 = por %p82, %p83
      %p86 = scmp.ne.s32.totalorder %s71, %s85
      %p87 = scmp.eq.s32.totalorder %s19, 0
      %p88 = por %p86, %p87
      %s89 = ssub.s32 %s13, %s20
      %p90 = scmp.eq.s32.totalorder %s89, 0
      %s92 = sadd.s32 %s91, 1
      %s93 = scalar_select %p90, %s91, %s92
      %p96 = pneg %p90
      %p97 = scmp.eq.s32.totalorder %s13, 1
      %p98 = por %p96, %p97
      %p99 = scmp.ne.s32.totalorder %s91, %s94
      %p100 = scmp.eq.s32.totalorder %s13, 0
      %p101 = por %p99, %p100
      %p102 = scmp.ne.s32.totalorder %s91, %s94
      %p103 = scmp.eq.s32.totalorder %s18, 1
      %p104 = por %p102, %p103
      %p105 = scmp.ne.s32.totalorder %s94, %s95
      %p106 = scmp.eq.s32.totalorder %s18, 0
      %p107 = por %p105, %p106
      %p108 = scmp.ne.s32.totalorder %s94, %s95
      %p109 = scmp.eq.s32.totalorder %s19, 1
      %p110 = por %p108, %p109
      %p112 = scmp.ne.s32.totalorder %s95, %s111
      %p113 = scmp.eq.s32.totalorder %s19, 0
      %p114 = por %p112, %p113
      %p115 = scmp.le.s32.totalorder 1, %s13
      %p116 = scmp.lt.s32.totalorder %s13, 3
      %p117 = pnand %p115, %p116
      %p118 = pneg %p117
      // Predicated region
      $region9: #{tpu_custom_call.1} parent=5 // pred_check
        _
      $region10: #{tpu_custom_call.1} parent=5 // pred_check_branch
        %120 = sbr.rel (%p117) target = $region12
      $region11: #{tpu_custom_call.1} parent=5 // pred_region
        %s121 = ssub.s32 %s13, 1
        // Predicated region
        $region13: #{tpu_custom_call.1} parent=11 // pred_check
          %p122 = pneg %p60
        $region14: #{tpu_custom_call.1} parent=11 // pred_check_branch
          %124 = sbr.rel (%p122) target = $region16
        $region15: #{tpu_custom_call.1} parent=11 // pred_region
          %126 = vsyncadd [#allocation3], 0
          %s127 = sshll.u32 %s1, 4
          %s128 = int_to_ptr.hbm [resolvable:$true] %s127
          %s129 = sshll.u32 [#allocation2], 4
          %s130 = int_to_ptr.vmem [resolvable:$true] %s129
          %135 = dma.hbm_to_vmem [thread:$0]  %s128, 3072, %s130, [#allocation3], 128, 128, 8
        $region16: #{tpu_custom_call.1} parent=11 // pred_fallthru
          _
        // Predicated region
        $region17: #{tpu_custom_call.1} parent=11 // pred_check
          %p136 = pneg %p81
        $region18: #{tpu_custom_call.1} parent=11 // pred_check_branch
          %138 = sbr.rel (%p136) target = $region20
        $region19: #{tpu_custom_call.1} parent=11 // pred_region
          _
        $region20: #{tpu_custom_call.1} parent=11 // pred_fallthru
          _
      $region12: #{tpu_custom_call.1} parent=5 // pred_fallthru
        _
      %p139 = scmp.lt.s32.totalorder %s13, 2
      // Predicated region
      $region21: #{tpu_custom_call.1} parent=5 // pred_check
        %p140 = pneg %p139
      $region22: #{tpu_custom_call.1} parent=5 // pred_check_branch
        %142 = sbr.rel (%p140) target = $region24
      $region23: #{tpu_custom_call.1} parent=5 // pred_region
        // Predicated region
        $region25: #{tpu_custom_call.1} parent=23 // pred_check
          %p143 = pneg %p33
        $region26: #{tpu_custom_call.1} parent=23 // pred_check_branch
          %145 = sbr.rel (%p143) target = $region28
        $region27: #{tpu_custom_call.1} parent=23 // pred_region
          %p146 = scmp.lt.s32.totalorder %s13, 1
          %s147 = scalar_select %p146, %s13, 1
          %s148 = smul.addr %s147, 3
          %s149 = smul.addr %s148, 8
          %s150 = scalar_lea.vmem %s0, %s149
        $region28: #{tpu_custom_call.1} parent=23 // pred_fallthru
          _
      $region24: #{tpu_custom_call.1} parent=5 // pred_fallthru
        _
      %p151 = scmp.le.s32.totalorder 1, %s13
      %p152 = scmp.lt.s32.totalorder %s13, 3
      %p153 = pnand %p151, %p152
      %p154 = pneg %p153
      // Predicated region
      $region29: #{tpu_custom_call.1} parent=5 // pred_check
        _
      $region30: #{tpu_custom_call.1} parent=5 // pred_check_branch
        %156 = sbr.rel (%p153) target = $region32
      $region31: #{tpu_custom_call.1} parent=5 // pred_region
        %s157 = ssub.s32 %s13, 1
        // Predicated region
        $region33: #{tpu_custom_call.1} parent=31 // pred_check
          %p158 = pneg %p60
        $region34: #{tpu_custom_call.1} parent=31 // pred_check_branch
          %160 = sbr.rel (%p158) target = $region36
        $region35: #{tpu_custom_call.1} parent=31 // pred_region
          %162 = dma.done [#allocation3], 3072
        $region36: #{tpu_custom_call.1} parent=31 // pred_fallthru
          _
        %p163 = scmp.lt.s32.totalorder %s18, 1
        %s164 = scalar_select %p163, %s18, 1
        %s165 = smul.addr %s164, 3
        %s166 = smul.addr %s165, 8
        %s167 = scalar_lea.vmem %s0, %s166
        %p168 = pneg %p39
        %p169 = pneg %p36
        %p170 = pneg %p60
        %p171 = pneg %p57
        %p172 = pneg %p81
        %p173 = pneg %p78
        %p174 = pneg %p107
        %p175 = pneg %p104
        %s176 = sand.u32 %s94, 1
        %s177 = scalar_lea.sflag [#allocation4], %s176
        %s178 = sand.u32 %s94, 1
        %s179 = smul.addr %s178, 16
        %s180 = scalar_lea.vmem [#allocation5], %s179
        %p181 = scmp.lt.s32.totalorder %s18, 1
        %s182 = scalar_select %p181, %s18, 1
        %s183 = smul.addr %s182, 3
        %s184 = smul.addr %s183, 8
        %s185 = scalar_lea.vmem %s0, %s184
        %v186 = vld [vmem:[%s185] sm:$0xff]
        %v187 = vld [vmem:[%s185 + $0x8] sm:$0xff]
        %v188 = vld [vmem:[%s185 + $0x10] sm:$0x3]
        %v189 = vld [vmem:[#allocation2] sm:$0xff]
        %v190 = vld [vmem:[#allocation2 + $0x8] sm:$0xff]
        %v191 = vld [vmem:[#allocation2 + $0x10] sm:$0xff]
        %v192 = vld [vmem:[#allocation2 + $0x18] sm:$0xff]
        %v193 = vld [vmem:[#allocation2 + $0x20] sm:$0xff]
        %v194 = vld [vmem:[#allocation2 + $0x28] sm:$0xff]
        %v195 = vld [vmem:[#allocation2 + $0x30] sm:$0xff]
        %v196 = vld [vmem:[#allocation2 + $0x38] sm:$0xff]
        %s197 = scalar_lea.vmem [#allocation2], 64
        %v198 = vld [vmem:[%s197] sm:$0xff]
        %v199 = vld [vmem:[%s197 + $0x8] sm:$0xff]
        %v200 = vld [vmem:[%s197 + $0x10] sm:$0xff]
        %v201 = vld [vmem:[%s197 + $0x18] sm:$0xff]
        %v202 = vld [vmem:[%s197 + $0x20] sm:$0xff]
        %v203 = vld [vmem:[%s197 + $0x28] sm:$0xff]
        %v204 = vld [vmem:[%s197 + $0x30] sm:$0xff]
        %v205 = vld [vmem:[%s197 + $0x38] sm:$0xff]
        %vm209 = vcmask 1046528
        %v210 = vrot.slane %v186, 1
        %v211 = vrot.slane %v187, 1
        %v212 = vsel %vm209, %v210, %v211
        %v213 = vrot.slane %v188, 1
        %v214 = vsel %vm209, %v211, %v213
        %vm215 = vcmask 523264
        %v216 = vsel %vm215, %v212, 0
        %v218 = vsel %vm215, %v214, 0
        %220 = vmatpush.msra.mxu0 0.0
        %221 = vmatpush.msra.mxu0 0.0
        %222 = vmatpush.msra.mxu0 0.0
        %223 = vmatpush.msra.mxu0 0.0
        %224 = vmatpush.msra.mxu0 0.0
        %225 = vmatpush.msra.mxu0 0.0
        %226 = vmatpush.msra.mxu0 0.0
        %227 = vmatpush.msra.mxu0 0.0
        %228 = vmatpush.msra.mxu0 %v205
        %229 = vmatpush.msra.mxu0 %v204
        %230 = vmatpush.msra.mxu0 %v203
        %231 = vmatpush.msra.mxu0 %v202
        %232 = vmatpush.msra.mxu0 %v201
        %233 = vmatpush.msra.mxu0 %v200
        %234 = vmatpush.msra.mxu0 %v199
        %235 = vmatpush.msra.mxu0 %v198
        %236 = vmatmul.f32.gmra.mxu0 %v216
        %v237 = vpop.f32.mrf.mxu0
        %v238 = vadd.f32 0.0, %v237
        %239 = vmatmul.f32.gmra.mxu0 %v218
        %v240 = vpop.f32.mrf.mxu0
        %v241 = vadd.f32 0.0, %v240
        %242 = vdwg.mxu0
        %v243 = vsel %vm215, %v186, 0
        %v245 = vsel %vm215, %v187, 0
        %247 = vmatpush.msra.mxu0 0.0
        %248 = vmatpush.msra.mxu0 0.0
        %249 = vmatpush.msra.mxu0 0.0
        %250 = vmatpush.msra.mxu0 0.0
        %251 = vmatpush.msra.mxu0 0.0
        %252 = vmatpush.msra.mxu0 0.0
        %253 = vmatpush.msra.mxu0 0.0
        %254 = vmatpush.msra.mxu0 0.0
        %255 = vmatpush.msra.mxu0 %v196
        %256 = vmatpush.msra.mxu0 %v195
        %257 = vmatpush.msra.mxu0 %v194
        %258 = vmatpush.msra.mxu0 %v193
        %259 = vmatpush.msra.mxu0 %v192
        %260 = vmatpush.msra.mxu0 %v191
        %261 = vmatpush.msra.mxu0 %v190
        %262 = vmatpush.msra.mxu0 %v189
        %263 = vmatmul.f32.gmra.mxu0 %v243
        %v264 = vpop.f32.mrf.mxu0
        %v265 = vadd.f32 %v238, %v264
        %266 = vmatmul.f32.gmra.mxu0 %v245
        %v267 = vpop.f32.mrf.mxu0
        %v268 = vadd.f32 %v241, %v267
        %269 = vdwg.mxu0
        %s270 = scalar_lea.vmem [#allocation2], 128
        %v271 = vld [vmem:[%s270] sm:$0xff]
        %v272 = vld [vmem:[%s270 + $0x8] sm:$0xff]
        %v273 = vld [vmem:[%s270 + $0x10] sm:$0xff]
        %v274 = vld [vmem:[%s270 + $0x18] sm:$0xff]
        %v275 = vld [vmem:[%s270 + $0x20] sm:$0xff]
        %v276 = vld [vmem:[%s270 + $0x28] sm:$0xff]
        %v277 = vld [vmem:[%s270 + $0x30] sm:$0xff]
        %v278 = vld [vmem:[%s270 + $0x38] sm:$0xff]
        %vm279 = vcmask 1045504
        %v280 = vrot.slane %v186, 2
        %v281 = vrot.slane %v187, 2
        %v282 = vsel %vm279, %v280, %v281
        %v283 = vrot.slane %v188, 2
        %v284 = vsel %vm279, %v281, %v283
        %v285 = vsel %vm215, %v282, 0
        %v287 = vsel %vm215, %v284, 0
        %289 = vmatpush.msra.mxu0 0.0
        %290 = vmatpush.msra.mxu0 0.0
        %291 = vmatpush.msra.mxu0 0.0
        %292 = vmatpush.msra.mxu0 0.0
        %293 = vmatpush.msra.mxu0 0.0
        %294 = vmatpush.msra.mxu0 0.0
        %295 = vmatpush.msra.mxu0 0.0
        %296 = vmatpush.msra.mxu0 0.0
        %297 = vmatpush.msra.mxu0 %v278
        %298 = vmatpush.msra.mxu0 %v277
        %299 = vmatpush.msra.mxu0 %v276
        %300 = vmatpush.msra.mxu0 %v275
        %301 = vmatpush.msra.mxu0 %v274
        %302 = vmatpush.msra.mxu0 %v273
        %303 = vmatpush.msra.mxu0 %v272
        %304 = vmatpush.msra.mxu0 %v271
        %305 = vmatmul.f32.gmra.mxu0 %v285
        %v306 = vpop.f32.mrf.mxu0
        %v307 = vadd.f32 0.0, %v306
        %308 = vmatmul.f32.gmra.mxu0 %v287
        %v309 = vpop.f32.mrf.mxu0
        %v310 = vadd.f32 0.0, %v309
        %311 = vdwg.mxu0
        %v312 = vadd.f32 %v265, %v307
        %v313 = vadd.f32 %v268, %v310
        %v314 = vld [vmem:[%s2] sm:$0x1]
        %v316 = vperm.slane %v314, 0
        %v318 = vadd.f32 %v312, %v316
        %v319 = vadd.f32 %v313, %v316
        %v320 = vmax.f32 %v318, 0.0
        %v321 = vmax.f32 %v319, 0.0
        %322 = vst [vmem:[%s180] sm:$0xff] %v320
        %323 = vst [vmem:[%s180 + $0x8] sm:$0xff] %v321
        %s324 = sand.u32 %s94, 1
        %s325 = scalar_lea.sflag [#allocation4], %s324
        %s326 = sand.u32 %s94, 1
        %s327 = smul.addr %s326, 16
        %s328 = scalar_lea.vmem [#allocation5], %s327
        // Predicated region
        $region37: #{tpu_custom_call.1} parent=31 // pred_check
          %p329 = pneg %p104
        $region38: #{tpu_custom_call.1} parent=31 // pred_check_branch
          %331 = sbr.rel (%p329) target = $region40
        $region39: #{tpu_custom_call.1} parent=31 // pred_region
          %333 = vsyncadd %s325, 0
          %s334 = smul.addr %s18, 2
          %s335 = smul.addr %s334, 8
          %s336 = scalar_lea.hbm %s3, %s335
          %s337 = sshll.u32 %s328, 4
          %s338 = int_to_ptr.vmem [resolvable:$true] %s337
          %s339 = sshll.u32 %s336, 4
          %s340 = int_to_ptr.hbm [resolvable:$true] %s339
          %345 = dma.vmem_to_hbm [thread:$0]  %s338, 256, %s340, %s325, 128, 128, 8
        $region40: #{tpu_custom_call.1} parent=31 // pred_fallthru
          _
      $region32: #{tpu_custom_call.1} parent=5 // pred_fallthru
        _
      %p346 = scmp.le.s32.totalorder 2, %s13
      // Predicated region
      $region41: #{tpu_custom_call.1} parent=5 // pred_check
        %p347 = pneg %p346
      $region42: #{tpu_custom_call.1} parent=5 // pred_check_branch
        %349 = sbr.rel (%p347) target = $region44
      $region43: #{tpu_custom_call.1} parent=5 // pred_region
        %s350 = ssub.s32 %s13, 2
        // Predicated region
        $region45: #{tpu_custom_call.1} parent=43 // pred_check
          %p351 = pneg %p110
        $region46: #{tpu_custom_call.1} parent=43 // pred_check_branch
          %353 = sbr.rel (%p351) target = $region48
        $region47: #{tpu_custom_call.1} parent=43 // pred_region
          %s354 = sand.u32 %s95, 1
          %s355 = scalar_lea.sflag [#allocation4], %s354
          %s356 = sand.u32 %s95, 1
          %s357 = smul.addr %s356, 16
          %s358 = scalar_lea.vmem [#allocation5], %s357
          %360 = dma.done %s355, 256
        $region48: #{tpu_custom_call.1} parent=43 // pred_fallthru
          _
      $region44: #{tpu_custom_call.1} parent=5 // pred_fallthru
        _
    $region6: #{tpu_custom_call.1} parent=1 // loop_footer
      %s17 = sadd.s32 1, %s13
    $region7: #{tpu_custom_call.1} parent=1 // loop_footer_branch
      %12 = sbr.rel target = $region3
    $region8: #{tpu_custom_call.1} parent=1 // loop_exit
      _
    %361 = vsyncpa [#allocation3], 1
    %s362 = scalar_lea.sflag [#allocation3], 1
    %363 = vsyncpa %s362, 1
    %364 = vsyncpa [#allocation4], 1
    %s365 = scalar_lea.sflag [#allocation4], 1
    %366 = vsyncpa %s365, 1

</llo_original>
